<compile_context>
chip_gen: v7x
topology: tpu7x:2x2x1
jax: 0.10.0
libtpu: 0.0.40
codegen_flags: <defaults>
</compile_context>

<pallas_src>
import math

import jax
import jax.numpy as jnp
from jax.experimental import pallas as pl
from jax.experimental.pallas import tpu as pltpu


def _round_up(x, m):
    return ((x + m - 1) // m) * m


def _linear_kernel(x_ref, w_ref, b_ref, o_ref):
    # x_ref: (tr, K)  activations tile
    # w_ref: (K, tn)  weight tile (already K-major -> no in-kernel transpose)
    # b_ref: (1, tn)  bias tile (f32)
    # o_ref: (tr, tn) output tile
    acc = jnp.dot(x_ref[...], w_ref[...], preferred_element_type=jnp.float32)
    o_ref[...] = (acc + b_ref[...]).astype(o_ref.dtype)


def _run_linear(x2d, w2d, b2d, out_dtype, *, block_rows, vmem_budget_bytes):
    """Tiled pallas_call computing x2d (R,K) @ w2d (K,N) + b2d (1,N) -> (R,N)."""
    R, K = x2d.shape
    K2, N = w2d.shape
    assert K == K2
    x_item = jnp.dtype(x2d.dtype).itemsize
    w_item = jnp.dtype(w2d.dtype).itemsize
    o_item = jnp.dtype(out_dtype).itemsize

    # Sublane granularity for the row (second-to-last) dim: 8 for f32,
    # 16 for bf16, 32 for int8 (avoids padded sublane packing).
    sub = {4: 8, 2: 16, 1: 32}.get(x_item, 8)

    # N tiling: keep the weight fully VMEM-resident when it fits comfortably,
    # otherwise stream 128-lane-multiple column tiles of it.
    w_bytes = K * N * w_item
    if N <= 128 or w_bytes <= vmem_budget_bytes // 2:
        tn = N
    else:
        tn = (vmem_budget_bytes // 4 // max(1, K * w_item)) // 128 * 128
        tn = int(min(max(128, tn), N))

    # Row tiling: large tiles amortize per-grid-step overhead, capped by VMEM.
    per_row = 2 * (K * x_item + tn * o_item)          # double-buffered bytes/row
    tr_cap = max(sub, (vmem_budget_bytes // 2) // per_row // sub * sub)
    tr = min(_round_up(max(1, block_rows), sub), tr_cap)
    if tr >= R:
        tr = R          # single row block; full-extent block is always legal
    # else: tr is a multiple of `sub`; a partial last block is masked by Pallas

    grid = (pl.cdiv(R, tr), pl.cdiv(N, tn))

    vmem_needed = (2 * tr * K * x_item + 2 * tr * tn * o_item
                   + 2 * K * tn * w_item + 2 * tn * 4)
    vmem_limit = int(min(max(2 * vmem_needed, 16 << 20), 64 << 20))

    cost = pl.CostEstimate(
        flops=2 * R * K * N,
        transcendentals=0,
        bytes_accessed=R * K * x_item + K * N * w_item + N * 4 + R * N * o_item,
    )

    return pl.pallas_call(
        _linear_kernel,
        out_shape=jax.ShapeDtypeStruct((R, N), out_dtype),
        grid=grid,
        in_specs=[
            pl.BlockSpec((tr, K), lambda i, j: (i, 0)),   # batch-tiled x
            pl.BlockSpec((K, tn), lambda i, j: (0, j)),   # (resident) weight
            pl.BlockSpec((1, tn), lambda i, j: (0, j)),   # bias
        ],
        out_specs=pl.BlockSpec((tr, tn), lambda i, j: (i, j)),
        compiler_params=pltpu.CompilerParams(
            dimension_semantics=("parallel", "parallel"),
            vmem_limit_bytes=vmem_limit,
        ),
        cost_estimate=cost,
    )(x2d, w2d, b2d)


def classifier_forward(x, weight, bias, *, block_rows=2048):
    """Forward pass of Classifier.fc1: x @ weight.T + bias.

    x:      (B, IN)   activations
    weight: (OUT, IN) PyTorch nn.Linear layout
    bias:   (OUT,)
    block_rows: batch rows per grid step (amortizes per-step overhead)
    """
    B, IN = x.shape
    OUT, IN_w = weight.shape
    assert IN == IN_w, f"shape mismatch: x IN={IN}, weight IN={IN_w}"
    out_dtype = x.dtype

    # Match the MXU input dtype to x (weight is tiny, one-time cast);
    # never cast x itself here -> no extra HBM pass over the activations.
    w = weight.astype(x.dtype)
    b = bias.astype(jnp.float32)

    vmem_budget = 24 << 20

    # Lane-dense packing factor (see header comment).
    P = 128 // OUT if (OUT < 128 and 128 % OUT == 0) else 1
    if P > 1 and (P * IN) * (P * OUT) * jnp.dtype(w.dtype).itemsize > (8 << 20):
        P = 1  # packed block-diagonal weight would not be VMEM-friendly

    if P > 1:
        Bp = _round_up(B, P)
        xp = x if Bp == B else jnp.pad(x, ((0, Bp - B), (0, 0)))  # <= P-1 rows
        x2d = xp.reshape(Bp // P, P * IN)             # row-major: free reshape
        # Block-diagonal weight: kron(eye(P), W^T) -> (P*IN, P*OUT), built once.
        w2d = jnp.kron(jnp.eye(P, dtype=w.dtype), w.T)
        b2d = jnp.tile(b, P).reshape(1, P * OUT)
        out = _run_linear(x2d, w2d, b2d, out_dtype,
                          block_rows=max(1, block_rows // P),
                          vmem_budget_bytes=vmem_budget)
        out = out.reshape(Bp, OUT)                    # row-major: free reshape
        return out if Bp == B else out[:B]

    # Fallback (OUT >= 128 or awkward OUT): weight pre-transposed once in the
    # wrapper so the (possibly resident) weight block is never re-transposed
    # inside the kernel.
    return _run_linear(x, w.T, b.reshape(1, OUT), out_dtype,
                       block_rows=block_rows, vmem_budget_bytes=vmem_budget)


def init_classifier_params(key, num_classes):
    """Deterministic init matching nn.Linear defaults (uniform +/- 1/sqrt(fan_in))."""
    in_features = 5 * num_classes
    out_features = num_classes
    kw, kb = jax.random.split(key)
    bound = 1.0 / math.sqrt(in_features)
    weight = jax.random.uniform(
        kw, (out_features, in_features), jnp.float32, minval=-bound, maxval=bound
    )
    bias = jax.random.uniform(
        kb, (out_features,), jnp.float32, minval=-bound, maxval=bound
    )
    return weight, bias


if __name__ == "__main__":
    num_classes = 16
    IN = 5 * num_classes

    key = jax.random.PRNGKey(0)
    k_x1, k_x2, k_p = jax.random.split(key, 3)
    weight, bias = init_classifier_params(k_p, num_classes)

    fwd = jax.jit(classifier_forward, static_argnames=("block_rows",))

    # Case 1: batch multiple of 8, small block_rows to exercise a multi-step
    # pipelined grid on the lane-dense packed path.
    b1 = 256
    x1 = jax.random.normal(k_x1, (b1, IN), dtype=jnp.float32)
    out1 = jax.block_until_ready(fwd(x1, weight, bias, block_rows=64))
    ref1 = jnp.dot(x1, weight.T, precision=jax.lax.Precision.HIGHEST) + bias
    assert out1.shape == (b1, num_classes)
    assert jnp.allclose(out1, ref1, atol=1e-3, rtol=1e-3), (
        float(jnp.max(jnp.abs(out1 - ref1))))

    # Case 2: ragged batch (not a multiple of 8) -> tiny pad-to-P path + slice.
    b2 = 100
    x2 = jax.random.normal(k_x2, (b2, IN), dtype=jnp.float32)
    out2 = jax.block_until_ready(fwd(x2, weight, bias))
    ref2 = jnp.dot(x2, weight.T, precision=jax.lax.Precision.HIGHEST) + bias
    assert out2.shape == (b2, num_classes)
    assert jnp.allclose(out2, ref2, atol=1e-3, rtol=1e-3), (
        float(jnp.max(jnp.abs(out2 - ref2))))

    print("KERNEL_OK")
</pallas_src>

<mosaic_0001>
module attributes {stable_mosaic.version = 11 : i64} {
  func.func @_linear_kernel(%arg0: i32, %arg1: i32, %arg2: memref<8x640xf32, #tpu.memory_space<vmem>>, %arg3: memref<640x128xf32, #tpu.memory_space<vmem>>, %arg4: memref<1x128xf32, #tpu.memory_space<vmem>>, %arg5: memref<8x128xf32, #tpu.memory_space<vmem>>) attributes {dimension_semantics = [#tpu.dimension_semantics<parallel>, #tpu.dimension_semantics<parallel>], iteration_bounds = array<i64: 4, 1>, scalar_prefetch = 0 : i64, scratch_operands = 0 : i64, tpu.core_type = #tpu.core_type<tc>, window_params = [{transform_indices = @transform_0, window_bounds = array<i64: 8, 640>}, {transform_indices = @transform_1, window_bounds = array<i64: 640, 128>}, {transform_indices = @transform_2, window_bounds = array<i64: 1, 128>}, {transform_indices = @transform_3, window_bounds = array<i64: 8, 128>}]} {
    %c0 = arith.constant 0 : index
    %c0_0 = arith.constant 0 : index
    %0 = vector.load %arg2[%c0, %c0_0] : memref<8x640xf32, #tpu.memory_space<vmem>>, vector<8x640xf32>
    %c0_1 = arith.constant 0 : index
    %c0_2 = arith.constant 0 : index
    %1 = vector.load %arg3[%c0_1, %c0_2] : memref<640x128xf32, #tpu.memory_space<vmem>>, vector<640x128xf32>
    %cst = arith.constant dense<0.000000e+00> : vector<8x128xf32>
    %2 = tpu.matmul %0, %1, %cst {dimension_numbers = #tpu.dot_dimension_numbers<[1], [0], [0], [1], [0, 0, 1, 1], [], []>} : vector<8x640xf32>, vector<640x128xf32>, vector<8x128xf32> -> vector<8x128xf32>
    %c0_3 = arith.constant 0 : index
    %c0_4 = arith.constant 0 : index
    %3 = vector.load %arg4[%c0_3, %c0_4] : memref<1x128xf32, #tpu.memory_space<vmem>>, vector<1x128xf32>
    %4 = vector.broadcast %3 : vector<1x128xf32> to vector<8x128xf32>
    %5 = arith.addf %2, %4 : vector<8x128xf32>
    %c0_5 = arith.constant 0 : index
    %c0_6 = arith.constant 0 : index
    %6 = vector.load %arg5[%c0_5, %c0_6] : memref<8x128xf32, #tpu.memory_space<vmem>>, vector<8x128xf32>
    tpu.vector_store %arg5[%c0_5, %c0_6], %5 {strides = array<i32>} : memref<8x128xf32, #tpu.memory_space<vmem>>, vector<8x128xf32>,
    return
  }
  func.func @transform_0(%arg0: i32, %arg1: i32) -> (i32, i32) {
    %c0_i32 = arith.constant 0 : i32
    %c0_i32_0 = arith.constant 0 : i32
    return %arg0, %c0_i32 : i32, i32
  }
  func.func @transform_1(%arg0: i32, %arg1: i32) -> (i32, i32) {
    %c0_i32 = arith.constant 0 : i32
    %c0_i32_0 = arith.constant 0 : i32
    return %c0_i32, %arg1 : i32, i32
  }
  func.func @transform_2(%arg0: i32, %arg1: i32) -> (i32, i32) {
    %c0_i32 = arith.constant 0 : i32
    %c0_i32_0 = arith.constant 0 : i32
    return %c0_i32, %arg1 : i32, i32
  }
  func.func @transform_3(%arg0: i32, %arg1: i32) -> (i32, i32) {
    %c0_i32 = arith.constant 0 : i32
    return %arg0, %arg1 : i32, i32
  }
}

</mosaic_0001>

<llo_original>
// kernel: tile.8
$region0: #{tile.8}
  #allocation0 [shape = 's32[1]{0}', space=sflag, size = 0x4, scoped, tag = 'scoped memory for tile.8']
  %s0 = inlined_call_operand.vmem [shape: f32[16], index: 0, kind: input, shape index: {}]
  %s1 = inlined_call_operand.vmem [shape: f32[8,16], index: 1, kind: output, shape index: {}]
  // Predicated region
  $region2: #{tile.8} parent=0 // pred_check
    _
  $region3: #{tile.8} parent=0 // pred_check_branch
    %3 = sbr.rel (0) target = $region5
  $region4: #{tile.8} parent=0 // pred_region
    _
  $region5: #{tile.8} parent=0 // pred_fallthru
    _
  %v4 = vld [vmem:[%s0] ss:$0 sm:$0xff]
  %5 = vst [vmem:[%s1] sm:$0xff] %v4

// kernel: tile.9
$region0: #{tile.9}
  %s0 = inlined_call_operand.vmem [shape: f32[8,16], index: 0, kind: input, shape index: {}]
  %s1 = inlined_call_operand.vmem [shape: f32[1,128], index: 1, kind: output, shape index: {}]
  $region1: #{tile.9} parent=0
    #allocation0 [shape = 'u8[4096]{0}', space=vmem, size = 0x1000, scoped, tag = 'scoped mem for output reshape']
    %v2 = vld [vmem:[%s0] sm:$0x1]
    %vm3 = vcmask 130048
    %4 = vst.msk [vmem:[#allocation0] sm:$0x1] %vm3, %v2
    %s5 = scalar_lea.vmem %s0, 7
    %v6 = vld [vmem:[%s5] sm:$0x1]
    %7 = vrot.lane.b32.xlu0 %v6, 112
    %v8 = vpop.permute.xlu0 %7
    %vm9 = vcmask 1048448
    %10 = vst.msk [vmem:[#allocation0] sm:$0x1] %vm9, %v8
    %s11 = scalar_lea.vmem %s0, 6
    %v12 = vld [vmem:[%s11] sm:$0x1]
    %13 = vrot.lane.b32.xlu0 %v12, 96
    %v14 = vpop.permute.xlu0 %13
    %vm15 = vcmask 917248
    %16 = vst.msk [vmem:[#allocation0] sm:$0x1] %vm15, %v14
    %s17 = scalar_lea.vmem %s0, 5
    %v18 = vld [vmem:[%s17] sm:$0x1]
    %19 = vrot.lane.b32.xlu0 %v18, 80
    %v20 = vpop.permute.xlu0 %19
    %vm21 = vcmask 786048
    %22 = vst.msk [vmem:[#allocation0] sm:$0x1] %vm21, %v20
    %s23 = scalar_lea.vmem %s0, 4
    %v24 = vld [vmem:[%s23] sm:$0x1]
    %25 = vrot.lane.b32.xlu0 %v24, 64
    %v26 = vpop.permute.xlu0 %25
    %vm27 = vcmask 654848
    %28 = vst.msk [vmem:[#allocation0] sm:$0x1] %vm27, %v26
    %s29 = scalar_lea.vmem %s0, 3
    %v30 = vld [vmem:[%s29] sm:$0x1]
    %31 = vrot.lane.b32.xlu0 %v30, 48
    %v32 = vpop.permute.xlu0 %31
    %vm33 = vcmask 523648
    %34 = vst.msk [vmem:[#allocation0] sm:$0x1] %vm33, %v32
    %s35 = scalar_lea.vmem %s0, 2
    %v36 = vld [vmem:[%s35] sm:$0x1]
    %37 = vrot.lane.b32.xlu0 %v36, 32
    %v38 = vpop.permute.xlu0 %37
    %vm39 = vcmask 392448
    %40 = vst.msk [vmem:[#allocation0] sm:$0x1] %vm39, %v38
    %s41 = scalar_lea.vmem %s0, 1
    %v42 = vld [vmem:[%s41] sm:$0x1]
    %43 = vrot.lane.b32.xlu0 %v42, 16
    %v44 = vpop.permute.xlu0 %43
    %vm45 = vcmask 261248
    %46 = vst.msk [vmem:[#allocation0] sm:$0x1] %vm45, %v44
    %s48 = sshllo.u32 0, 1
    %v50 = vld [vmem:[#allocation0] sm:%s48]
    %s51 = sshllo.u32 0, 1
    %52 = vst [vmem:[%s1] sm:%s51] %v50

// kernel: classifier_forward.1
$region0: #{classifier_forward.1}
  #allocation0 [shape = 'u32[]', space=smem, size = 0x4, offset = 0x4, fixed_abs, tag = 'smem constant byte address 0x4 - core index']
  #allocation1 [shape = 'u32[144,128]{1,0:T(1,128)}', space=vmem, size = 0x12000, scoped, tag = 'internal scratch']
  %s0 = inlined_call_operand.vmem [shape: f32[32,640], index: 0, kind: input, shape index: {}]
  %s1 = inlined_call_operand.vmem [shape: f32[640,128], index: 1, kind: input, shape index: {}]
  %s2 = inlined_call_operand.vmem [shape: f32[1,128], index: 2, kind: input, shape index: {}]
  %s3 = inlined_call_operand.vmem [shape: f32[32,128], index: 3, kind: output, shape index: {}]
  %s4 = sld [smem:[#allocation0]]
  $region45: #{classifier_forward.1} parent=0
    _
  %s6 = ssub.s32 1, %s4
  %s7 = scalar_select 0, %s6, %s4
  loop: start=0, step=1, limit=6
  $region2: #{classifier_forward.1} parent=0 // loop_pre_header
    _
  $region3: #{classifier_forward.1} parent=0 // loop_header
    %s9 = sphi 0, %s13
    %p10 = scmp.ge.s32.totalorder %s9, 6
    %s16 = sphi 0, %s28
    %s17 = sphi 0, %s24
    %s18 = sphi 0, %s16
    %s19 = sphi 0, %s17
    %s20 = sphi 0, %s18
    %s21 = sphi 0, %s19
    %s31 = sphi 0, %s33
    %s34 = sphi 0, %s31
    %s35 = sphi 0, %s34
    %s51 = sphi 0, %s35
    %s57 = sphi 0, %s59
    %s60 = sphi 0, %s57
    %s61 = sphi 0, %s60
    %s77 = sphi 0, %s61
    %s83 = sphi 0, %s85
    %s86 = sphi 0, %s83
    %s87 = sphi 0, %s86
    %s103 = sphi 0, %s87
    %s111 = sphi 0, %s113
    %s114 = sphi 0, %s111
    %s115 = sphi 0, %s114
    %s131 = sphi 0, %s115
  $region4: #{classifier_forward.1} parent=0 // loop_header_branch
    %12 = sbr.rel (%p10) target = $region8
  $region5: #{classifier_forward.1} parent=0 // loop_body
    %s14 = ssub.s32 %s9, 1
    %s15 = ssub.s32 %s9, 2
    %s22 = sadd.s32 1, %s17
    %p23 = scmp.ge.s32.totalorder %s22, 1
    %s24 = scalar_select %p23, 0, %s22
    %s25 = sadd.s32 1, %s16
    %s26 = scalar_select %p23, %s25, %s16
    %p27 = scmp.ge.s32.totalorder %s26, 4
    %s28 = scalar_select %p27, 0, %s26
    %s29 = ssub.s32 %s16, %s28
    %p30 = scmp.eq.s32.totalorder %s29, 0
    %s32 = sadd.s32 %s31, 1
    %s33 = scalar_select %p30, %s31, %s32
    %p36 = pneg %p30
    %p37 = scmp.eq.s32.totalorder %s9, 3
    %p38 = por %p36, %p37
    %p39 = scmp.ne.s32.totalorder %s31, %s34
    %p40 = scmp.eq.s32.totalorder %s9, 0
    %p41 = por %p39, %p40
    %p42 = scmp.ne.s32.totalorder %s31, %s34
    %p43 = scmp.eq.s32.totalorder %s14, 3
    %p44 = por %p42, %p43
    %p45 = scmp.ne.s32.totalorder %s34, %s35
    %p46 = scmp.eq.s32.totalorder %s14, 0
    %p47 = por %p45, %p46
    %p48 = scmp.ne.s32.totalorder %s34, %s35
    %p49 = scmp.eq.s32.totalorder %s15, 3
    %p50 = por %p48, %p49
    %p52 = scmp.ne.s32.totalorder %s35, %s51
    %p53 = scmp.eq.s32.totalorder %s15, 0
    %p54 = por %p52, %p53
    %s55 = ssub.s32 %s17, %s24
    %p56 = scmp.eq.s32.totalorder %s55, 0
    %s58 = sadd.s32 %s57, 1
    %s59 = scalar_select %p56, %s57, %s58
    %p62 = pneg %p56
    %p63 = scmp.eq.s32.totalorder %s9, 3
    %p64 = por %p62, %p63
    %p65 = scmp.ne.s32.totalorder %s57, %s60
    %p66 = scmp.eq.s32.totalorder %s9, 0
    %p67 = por %p65, %p66
    %p68 = scmp.ne.s32.totalorder %s57, %s60
    %p69 = scmp.eq.s32.totalorder %s14, 3
    %p70 = por %p68, %p69
    %p71 = scmp.ne.s32.totalorder %s60, %s61
    %p72 = scmp.eq.s32.totalorder %s14, 0
    %p73 = por %p71, %p72
    %p74 = scmp.ne.s32.totalorder %s60, %s61
    %p75 = scmp.eq.s32.totalorder %s15, 3
    %p76 = por %p74, %p75
    %p78 = scmp.ne.s32.totalorder %s61, %s77
    %p79 = scmp.eq.s32.totalorder %s15, 0
    %p80 = por %p78, %p79
    %s81 = ssub.s32 %s17, %s24
    %p82 = scmp.eq.s32.totalorder %s81, 0
    %s84 = sadd.s32 %s83, 1
    %s85 = scalar_select %p82, %s83, %s84
    %p88 = pneg %p82
    %p89 = scmp.eq.s32.totalorder %s9, 3
    %p90 = por %p88, %p89
    %p91 = scmp.ne.s32.totalorder %s83, %s86
    %p92 = scmp.eq.s32.totalorder %s9, 0
    %p93 = por %p91, %p92
    %p94 = scmp.ne.s32.totalorder %s83, %s86
    %p95 = scmp.eq.s32.totalorder %s14, 3
    %p96 = por %p94, %p95
    %p97 = scmp.ne.s32.totalorder %s86, %s87
    %p98 = scmp.eq.s32.totalorder %s14, 0
    %p99 = por %p97, %p98
    %p100 = scmp.ne.s32.totalorder %s86, %s87
    %p101 = scmp.eq.s32.totalorder %s15, 3
    %p102 = por %p100, %p101
    %p104 = scmp.ne.s32.totalorder %s87, %s103
    %p105 = scmp.eq.s32.totalorder %s15, 0
    %p106 = por %p104, %p105
    %s107 = ssub.s32 %s16, %s28
    %s108 = ssub.s32 %s17, %s24
    %s109 = sor.u32 %s107, %s108
    %p110 = scmp.eq.s32.totalorder %s109, 0
    %s112 = sadd.s32 %s111, 1
    %s113 = scalar_select %p110, %s111, %s112
    %p116 = pneg %p110
    %p117 = scmp.eq.s32.totalorder %s9, 3
    %p118 = por %p116, %p117
    %p119 = scmp.ne.s32.totalorder %s111, %s114
    %p120 = scmp.eq.s32.totalorder %s9, 0
    %p121 = por %p119, %p120
    %p122 = scmp.ne.s32.totalorder %s111, %s114
    %p123 = scmp.eq.s32.totalorder %s14, 3
    %p124 = por %p122, %p123
    %p125 = scmp.ne.s32.totalorder %s114, %s115
    %p126 = scmp.eq.s32.totalorder %s14, 0
    %p127 = por %p125, %p126
    %p128 = scmp.ne.s32.totalorder %s114, %s115
    %p129 = scmp.eq.s32.totalorder %s15, 3
    %p130 = por %p128, %p129
    %p132 = scmp.ne.s32.totalorder %s115, %s131
    %p133 = scmp.eq.s32.totalorder %s15, 0
    %p134 = por %p132, %p133
    %p135 = scmp.le.s32.totalorder 1, %s9
    %p136 = scmp.lt.s32.totalorder %s9, 5
    %p137 = pnand %p135, %p136
    %p138 = pneg %p137
    // Predicated region
    $region9: #{classifier_forward.1} parent=5 // pred_check
      _
    $region10: #{classifier_forward.1} parent=5 // pred_check_branch
      %140 = sbr.rel (%p137) target = $region12
    $region11: #{classifier_forward.1} parent=5 // pred_region
      %s141 = ssub.s32 %s9, 1
      // Predicated region
      $region13: #{classifier_forward.1} parent=11 // pred_check
        %p142 = pneg %p73
      $region14: #{classifier_forward.1} parent=11 // pred_check_branch
        %144 = sbr.rel (%p142) target = $region16
      $region15: #{classifier_forward.1} parent=11 // pred_region
        %p145 = scmp.lt.s32.totalorder %s19, 0
        %s146 = scalar_select %p145, %s19, 0
        %s147 = smul.addr %s146, 8
        %s148 = scalar_lea.vmem %s1, %s147
      $region16: #{classifier_forward.1} parent=11 // pred_fallthru
        _
      // Predicated region
      $region17: #{classifier_forward.1} parent=11 // pred_check
        %p149 = pneg %p99
      $region18: #{classifier_forward.1} parent=11 // pred_check_branch
        %151 = sbr.rel (%p149) target = $region20
      $region19: #{classifier_forward.1} parent=11 // pred_region
        %p152 = scmp.lt.s32.totalorder %s19, 0
        %s153 = scalar_select %p152, %s19, 0
        %s154 = scalar_lea.vmem %s2, %s153
      $region20: #{classifier_forward.1} parent=11 // pred_fallthru
        _
    $region12: #{classifier_forward.1} parent=5 // pred_fallthru
      _
    %p155 = scmp.lt.s32.totalorder %s9, 4
    // Predicated region
    $region21: #{classifier_forward.1} parent=5 // pred_check
      %p156 = pneg %p155
    $region22: #{classifier_forward.1} parent=5 // pred_check_branch
      %158 = sbr.rel (%p156) target = $region24
    $region23: #{classifier_forward.1} parent=5 // pred_region
      // Predicated region
      $region25: #{classifier_forward.1} parent=23 // pred_check
        %p159 = pneg %p41
      $region26: #{classifier_forward.1} parent=23 // pred_check_branch
        %161 = sbr.rel (%p159) target = $region28
      $region27: #{classifier_forward.1} parent=23 // pred_region
        %p162 = scmp.lt.s32.totalorder %s16, 3
        %s163 = scalar_select %p162, %s16, 3
        %s164 = smul.addr %s163, 5
        %s165 = smul.addr %s164, 8
        %s166 = scalar_lea.vmem %s0, %s165
      $region28: #{classifier_forward.1} parent=23 // pred_fallthru
        _
    $region24: #{classifier_forward.1} parent=5 // pred_fallthru
      _
    %p167 = scmp.le.s32.totalorder 1, %s9
    %p168 = scmp.lt.s32.totalorder %s9, 5
    %p169 = pnand %p167, %p168
    %p170 = pneg %p169
    // Predicated region
    $region29: #{classifier_forward.1} parent=5 // pred_check
      _
    $region30: #{classifier_forward.1} parent=5 // pred_check_branch
      %172 = sbr.rel (%p169) target = $region32
    $region31: #{classifier_forward.1} parent=5 // pred_region
      %s173 = ssub.s32 %s9, 1
      %p174 = scmp.lt.s32.totalorder %s18, 3
      %s175 = scalar_select %p174, %s18, 3
      %s176 = smul.addr %s175, 5
      %s177 = smul.addr %s176, 8
      %s178 = scalar_lea.vmem %s0, %s177
      %p179 = pneg %p47
      %p180 = pneg %p44
      %p181 = scmp.lt.s32.totalorder %s19, 0
      %s182 = scalar_select %p181, %s19, 0
      %s183 = smul.addr %s182, 8
      %s184 = scalar_lea.vmem %s1, %s183
      %p185 = pneg %p73
      %p186 = pneg %p70
      %p187 = scmp.lt.s32.totalorder %s19, 0
      %s188 = scalar_select %p187, %s19, 0
      %s189 = scalar_lea.vmem %s2, %s188
      %p190 = pneg %p99
      %p191 = pneg %p96
      %p192 = pneg %p127
      %p193 = pneg %p124
      %p194 = scmp.lt.s32.totalorder %s18, 3
      %s195 = scalar_select %p194, %s18, 3
      %p196 = scmp.lt.s32.totalorder %s19, 0
      %s197 = scalar_select %p196, %s19, 0
      %s198 = sadd.s32 %s197, %s195
      %s199 = smul.addr %s198, 8
      %s200 = scalar_lea.vmem %s3, %s199
      %p201 = scmp.lt.s32.totalorder %s18, 3
      %s202 = scalar_select %p201, %s18, 3
      %s203 = smul.addr %s202, 5
      %s204 = smul.addr %s203, 8
      %s205 = scalar_lea.vmem %s0, %s204
      %p206 = scmp.lt.s32.totalorder %s19, 0
      %s207 = scalar_select %p206, %s19, 0
      %s208 = smul.addr %s207, 8
      %s209 = scalar_lea.vmem %s1, %s208
      %p210 = scmp.lt.s32.totalorder %s19, 0
      %s211 = scalar_select %p210, %s19, 0
      %s212 = scalar_lea.vmem %s2, %s211
      %p213 = scmp.lt.s32.totalorder %s18, 3
      %s214 = scalar_select %p213, %s18, 3
      %p215 = scmp.lt.s32.totalorder %s19, 0
      %s216 = scalar_select %p215, %s19, 0
      %s217 = sadd.s32 %s216, %s214
      %s218 = smul.addr %s217, 8
      %s219 = scalar_lea.vmem %s3, %s218
      %v220 = vld [vmem:[%s205] sm:$0xff]
      %v221 = vld [vmem:[%s205 + $0x8] sm:$0xff]
      %v222 = vld [vmem:[%s205 + $0x10] sm:$0xff]
      %v223 = vld [vmem:[%s205 + $0x18] sm:$0xff]
      %v224 = vld [vmem:[%s205 + $0x20] sm:$0xff]
      %v225 = vld [vmem:[%s209] sm:$0xff]
      %v226 = vld [vmem:[%s209 + $0x8] sm:$0xff]
      %v227 = vld [vmem:[%s209 + $0x10] sm:$0xff]
      %v228 = vld [vmem:[%s209 + $0x18] sm:$0xff]
      %v229 = vld [vmem:[%s209 + $0x20] sm:$0xff]
      %v230 = vld [vmem:[%s209 + $0x28] sm:$0xff]
      %v231 = vld [vmem:[%s209 + $0x30] sm:$0xff]
      %v232 = vld [vmem:[%s209 + $0x38] sm:$0xff]
      %v233 = vld [vmem:[%s209 + $0x40] sm:$0xff]
      %v234 = vld [vmem:[%s209 + $0x48] sm:$0xff]
      %v235 = vld [vmem:[%s209 + $0x50] sm:$0xff]
      %v236 = vld [vmem:[%s209 + $0x58] sm:$0xff]
      %v237 = vld [vmem:[%s209 + $0x60] sm:$0xff]
      %v238 = vld [vmem:[%s209 + $0x68] sm:$0xff]
      %v239 = vld [vmem:[%s209 + $0x70] sm:$0xff]
      %v240 = vld [vmem:[%s209 + $0x78] sm:$0xff]
      %v241 = vld [vmem:[%s209 + $0x80] sm:$0xff]
      %v242 = vld [vmem:[%s209 + $0x88] sm:$0xff]
      %v243 = vld [vmem:[%s209 + $0x90] sm:$0xff]
      %v244 = vld [vmem:[%s209 + $0x98] sm:$0xff]
      %v245 = vld [vmem:[%s209 + $0xa0] sm:$0xff]
      %v246 = vld [vmem:[%s209 + $0xa8] sm:$0xff]
      %v247 = vld [vmem:[%s209 + $0xb0] sm:$0xff]
      %v248 = vld [vmem:[%s209 + $0xb8] sm:$0xff]
      %v249 = vld [vmem:[%s209 + $0xc0] sm:$0xff]
      %v250 = vld [vmem:[%s209 + $0xc8] sm:$0xff]
      %v251 = vld [vmem:[%s209 + $0xd0] sm:$0xff]
      %v252 = vld [vmem:[%s209 + $0xd8] sm:$0xff]
      %v253 = vld [vmem:[%s209 + $0xe0] sm:$0xff]
      %v254 = vld [vmem:[%s209 + $0xe8] sm:$0xff]
      %v255 = vld [vmem:[%s209 + $0xf0] sm:$0xff]
      %v256 = vld [vmem:[%s209 + $0xf8] sm:$0xff]
      %v257 = vld [vmem:[%s209 + $0x100] sm:$0xff]
      %v258 = vld [vmem:[%s209 + $0x108] sm:$0xff]
      %v259 = vld [vmem:[%s209 + $0x110] sm:$0xff]
      %v260 = vld [vmem:[%s209 + $0x118] sm:$0xff]
      %v261 = vld [vmem:[%s209 + $0x120] sm:$0xff]
      %v262 = vld [vmem:[%s209 + $0x128] sm:$0xff]
      %v263 = vld [vmem:[%s209 + $0x130] sm:$0xff]
      %v264 = vld [vmem:[%s209 + $0x138] sm:$0xff]
      %v265 = vld [vmem:[%s209 + $0x140] sm:$0xff]
      %v266 = vld [vmem:[%s209 + $0x148] sm:$0xff]
      %v267 = vld [vmem:[%s209 + $0x150] sm:$0xff]
      %v268 = vld [vmem:[%s209 + $0x158] sm:$0xff]
      %v269 = vld [vmem:[%s209 + $0x160] sm:$0xff]
      %v270 = vld [vmem:[%s209 + $0x168] sm:$0xff]
      %v271 = vld [vmem:[%s209 + $0x170] sm:$0xff]
      %v272 = vld [vmem:[%s209 + $0x178] sm:$0xff]
      %v273 = vld [vmem:[%s209 + $0x180] sm:$0xff]
      %v274 = vld [vmem:[%s209 + $0x188] sm:$0xff]
      %v275 = vld [vmem:[%s209 + $0x190] sm:$0xff]
      %v276 = vld [vmem:[%s209 + $0x198] sm:$0xff]
      %v277 = vld [vmem:[%s209 + $0x1a0] sm:$0xff]
      %v278 = vld [vmem:[%s209 + $0x1a8] sm:$0xff]
      %v279 = vld [vmem:[%s209 + $0x1b0] sm:$0xff]
      %v280 = vld [vmem:[%s209 + $0x1b8] sm:$0xff]
      %v281 = vld [vmem:[%s209 + $0x1c0] sm:$0xff]
      %v282 = vld [vmem:[%s209 + $0x1c8] sm:$0xff]
      %v283 = vld [vmem:[%s209 + $0x1d0] sm:$0xff]
      %v284 = vld [vmem:[%s209 + $0x1d8] sm:$0xff]
      %v285 = vld [vmem:[%s209 + $0x1e0] sm:$0xff]
      %v286 = vld [vmem:[%s209 + $0x1e8] sm:$0xff]
      %v287 = vld [vmem:[%s209 + $0x1f0] sm:$0xff]
      %v288 = vld [vmem:[%s209 + $0x1f8] sm:$0xff]
      %v289 = vld [vmem:[%s209 + $0x200] sm:$0xff]
      %v290 = vld [vmem:[%s209 + $0x208] sm:$0xff]
      %v291 = vld [vmem:[%s209 + $0x210] sm:$0xff]
      %v292 = vld [vmem:[%s209 + $0x218] sm:$0xff]
      %v293 = vld [vmem:[%s209 + $0x220] sm:$0xff]
      %v294 = vld [vmem:[%s209 + $0x228] sm:$0xff]
      %v295 = vld [vmem:[%s209 + $0x230] sm:$0xff]
      %v296 = vld [vmem:[%s209 + $0x238] sm:$0xff]
      %v297 = vld [vmem:[%s209 + $0x240] sm:$0xff]
      %v298 = vld [vmem:[%s209 + $0x248] sm:$0xff]
      %v299 = vld [vmem:[%s209 + $0x250] sm:$0xff]
      %v300 = vld [vmem:[%s209 + $0x258] sm:$0xff]
      %v301 = vld [vmem:[%s209 + $0x260] sm:$0xff]
      %v302 = vld [vmem:[%s209 + $0x268] sm:$0xff]
      %v303 = vld [vmem:[%s209 + $0x270] sm:$0xff]
      %v304 = vld [vmem:[%s209 + $0x278] sm:$0xff]
      %v305 = vld [vmem:[%s212] sm:$0x1]
      %v307 = vlaneseq
      %v308 = vshrl.u32 %v307, 7
      %v309 = vsub.s32 0, %v308
      %v310 = vrot.slane %v305, %v309
      %312 = vmatprep.subr.mxu0 0.0
      %313 = vmatpush1.msra.mxu0 %v225
      %314 = vmatprep.subr.mxu0 0.0
      %315 = vmatpush1.msra.mxu0 %v226
      %316 = vmatprep.subr.mxu0 0.0
      %317 = vmatpush1.msra.mxu0 %v227
      %318 = vmatprep.subr.mxu0 0.0
      %319 = vmatpush1.msra.mxu0 %v228
      %320 = vmatprep.subr.mxu0 0.0
      %321 = vmatpush1.msra.mxu0 %v229
      %322 = vmatprep.subr.mxu0 0.0
      %323 = vmatpush1.msra.mxu0 %v230
      %324 = vmatprep.subr.mxu0 0.0
      %325 = vmatpush1.msra.mxu0 %v231
      %326 = vmatprep.subr.mxu0 0.0
      %327 = vmatpush1.msra.mxu0 %v232
      %328 = vmatprep.subr.mxu0 0.0
      %329 = vmatpush1.msra.mxu0 %v233
      %330 = vmatprep.subr.mxu0 0.0
      %331 = vmatpush1.msra.mxu0 %v234
      %332 = vmatprep.subr.mxu0 0.0
      %333 = vmatpush1.msra.mxu0 %v235
      %334 = vmatprep.subr.mxu0 0.0
      %335 = vmatpush1.msra.mxu0 %v236
      %336 = vmatprep.subr.mxu0 0.0
      %337 = vmatpush1.msra.mxu0 %v237
      %338 = vmatprep.subr.mxu0 0.0
      %339 = vmatpush1.msra.mxu0 %v238
      %340 = vmatprep.subr.mxu0 0.0
      %341 = vmatpush1.msra.mxu0 %v239
      %342 = vmatprep.subr.mxu0 0.0
      %343 = vmatpush1.msra.mxu0 %v240
      %344 = vmatprep.subr.mxu0 0.0
      %345 = vmatpush1.msra.mxu0 %v241
      %346 = vmatprep.subr.mxu0 0.0
      %347 = vmatpush1.msra.mxu0 %v242
      %348 = vmatprep.subr.mxu0 0.0
      %349 = vmatpush1.msra.mxu0 %v243
      %350 = vmatprep.subr.mxu0 0.0
      %351 = vmatpush1.msra.mxu0 %v244
      %352 = vmatprep.subr.mxu0 0.0
      %353 = vmatpush1.msra.mxu0 %v245
      %354 = vmatprep.subr.mxu0 0.0
      %355 = vmatpush1.msra.mxu0 %v246
      %356 = vmatprep.subr.mxu0 0.0
      %357 = vmatpush1.msra.mxu0 %v247
      %358 = vmatprep.subr.mxu0 0.0
      %359 = vmatpush1.msra.mxu0 %v248
      %360 = vmatprep.subr.mxu0 0.0
      %361 = vmatpush1.msra.mxu0 %v249
      %362 = vmatprep.subr.mxu0 0.0
      %363 = vmatpush1.msra.mxu0 %v250
      %364 = vmatprep.subr.mxu0 0.0
      %365 = vmatpush1.msra.mxu0 %v251
      %366 = vmatprep.subr.mxu0 0.0
      %367 = vmatpush1.msra.mxu0 %v252
      %368 = vmatprep.subr.mxu0 0.0
      %369 = vmatpush1.msra.mxu0 %v253
      %370 = vmatprep.subr.mxu0 0.0
      %371 = vmatpush1.msra.mxu0 %v254
      %372 = vmatprep.subr.mxu0 0.0
      %373 = vmatpush1.msra.mxu0 %v255
      %374 = vmatprep.subr.mxu0 0.0
      %375 = vmatpush1.msra.mxu0 %v256
      %376 = vmatprep.mubr.f32.mxu0 %v221
      %377 = vmatmul.mubr.f32.gmra.mrb[0].mxu0 %v220
      %v378 = vpop.f32.mrb[0].mxu0
      %v379 = vadd.f32 %v310, %v378
      %v380 = vpop.f32.mrb[0].mxu0
      %381 = vdwg.mxu0
      %382 = vmatprep.subr.mxu0 0.0
      %383 = vmatpush1.msra.mxu0 %v257
      %384 = vmatprep.subr.mxu0 0.0
      %385 = vmatpush1.msra.mxu0 %v258
      %386 = vmatprep.subr.mxu0 0.0
      %387 = vmatpush1.msra.mxu0 %v259
      %388 = vmatprep.subr.mxu0 0.0
      %389 = vmatpush1.msra.mxu0 %v260
      %390 = vmatprep.subr.mxu0 0.0
      %391 = vmatpush1.msra.mxu0 %v261
      %392 = vmatprep.subr.mxu0 0.0
      %393 = vmatpush1.msra.mxu0 %v262
      %394 = vmatprep.subr.mxu0 0.0
      %395 = vmatpush1.msra.mxu0 %v263
      %396 = vmatprep.subr.mxu0 0.0
      %397 = vmatpush1.msra.mxu0 %v264
      %398 = vmatprep.subr.mxu0 0.0
      %399 = vmatpush1.msra.mxu0 %v265
      %400 = vmatprep.subr.mxu0 0.0
      %401 = vmatpush1.msra.mxu0 %v266
      %402 = vmatprep.subr.mxu0 0.0
      %403 = vmatpush1.msra.mxu0 %v267
      %404 = vmatprep.subr.mxu0 0.0
      %405 = vmatpush1.msra.mxu0 %v268
      %406 = vmatprep.subr.mxu0 0.0
      %407 = vmatpush1.msra.mxu0 %v269
      %408 = vmatprep.subr.mxu0 0.0
      %409 = vmatpush1.msra.mxu0 %v270
      %410 = vmatprep.subr.mxu0 0.0
      %411 = vmatpush1.msra.mxu0 %v271
      %412 = vmatprep.subr.mxu0 0.0
      %413 = vmatpush1.msra.mxu0 %v272
      %414 = vmatprep.subr.mxu0 0.0
      %415 = vmatpush1.msra.mxu0 %v273
      %416 = vmatprep.subr.mxu0 0.0
      %417 = vmatpush1.msra.mxu0 %v274
      %418 = vmatprep.subr.mxu0 0.0
      %419 = vmatpush1.msra.mxu0 %v275
      %420 = vmatprep.subr.mxu0 0.0
      %421 = vmatpush1.msra.mxu0 %v276
      %422 = vmatprep.subr.mxu0 0.0
      %423 = vmatpush1.msra.mxu0 %v277
      %424 = vmatprep.subr.mxu0 0.0
      %425 = vmatpush1.msra.mxu0 %v278
      %426 = vmatprep.subr.mxu0 0.0
      %427 = vmatpush1.msra.mxu0 %v279
      %428 = vmatprep.subr.mxu0 0.0
      %429 = vmatpush1.msra.mxu0 %v280
      %430 = vmatprep.subr.mxu0 0.0
      %431 = vmatpush1.msra.mxu0 %v281
      %432 = vmatprep.subr.mxu0 0.0
      %433 = vmatpush1.msra.mxu0 %v282
      %434 = vmatprep.subr.mxu0 0.0
      %435 = vmatpush1.msra.mxu0 %v283
      %436 = vmatprep.subr.mxu0 0.0
      %437 = vmatpush1.msra.mxu0 %v284
      %438 = vmatprep.subr.mxu0 0.0
      %439 = vmatpush1.msra.mxu0 %v285
      %440 = vmatprep.subr.mxu0 0.0
      %441 = vmatpush1.msra.mxu0 %v286
      %442 = vmatprep.subr.mxu0 0.0
      %443 = vmatpush1.msra.mxu0 %v287
      %444 = vmatprep.subr.mxu0 0.0
      %445 = vmatpush1.msra.mxu0 %v288
      %446 = vmatprep.mubr.f32.mxu0 %v223
      %447 = vmatmul.mubr.f32.gmra.mrb[0].mxu0 %v222
      %v448 = vpop.f32.mrb[0].mxu0
      %v449 = vadd.f32 %v379, %v448
      %v450 = vpop.f32.mrb[0].mxu0
      %451 = vdwg.mxu0
      %452 = vmatprep.subr.mxu0 0.0
      %453 = vmatpush1.msra.mxu0 %v289
      %454 = vmatprep.subr.mxu0 0.0
      %455 = vmatpush1.msra.mxu0 %v290
      %456 = vmatprep.subr.mxu0 0.0
      %457 = vmatpush1.msra.mxu0 %v291
      %458 = vmatprep.subr.mxu0 0.0
      %459 = vmatpush1.msra.mxu0 %v292
      %460 = vmatprep.subr.mxu0 0.0
      %461 = vmatpush1.msra.mxu0 %v293
      %462 = vmatprep.subr.mxu0 0.0
      %463 = vmatpush1.msra.mxu0 %v294
      %464 = vmatprep.subr.mxu0 0.0
      %465 = vmatpush1.msra.mxu0 %v295
      %466 = vmatprep.subr.mxu0 0.0
      %467 = vmatpush1.msra.mxu0 %v296
      %468 = vmatprep.subr.mxu0 0.0
      %469 = vmatpush1.msra.mxu0 %v297
      %470 = vmatprep.subr.mxu0 0.0
      %471 = vmatpush1.msra.mxu0 %v298
      %472 = vmatprep.subr.mxu0 0.0
      %473 = vmatpush1.msra.mxu0 %v299
      %474 = vmatprep.subr.mxu0 0.0
      %475 = vmatpush1.msra.mxu0 %v300
      %476 = vmatprep.subr.mxu0 0.0
      %477 = vmatpush1.msra.mxu0 %v301
      %478 = vmatprep.subr.mxu0 0.0
      %479 = vmatpush1.msra.mxu0 %v302
      %480 = vmatprep.subr.mxu0 0.0
      %481 = vmatpush1.msra.mxu0 %v303
      %482 = vmatprep.subr.mxu0 0.0
      %483 = vmatpush1.msra.mxu0 %v304
      %484 = vmatprep.subr.mxu0 0.0
      %485 = vmatpush1.msra.mxu0 0.0
      %486 = vmatprep.subr.mxu0 0.0
      %487 = vmatpush1.msra.mxu0 0.0
      %488 = vmatprep.subr.mxu0 0.0
      %489 = vmatpush1.msra.mxu0 0.0
      %490 = vmatprep.subr.mxu0 0.0
      %491 = vmatpush1.msra.mxu0 0.0
      %492 = vmatprep.subr.mxu0 0.0
      %493 = vmatpush1.msra.mxu0 0.0
      %494 = vmatprep.subr.mxu0 0.0
      %495 = vmatpush1.msra.mxu0 0.0
      %496 = vmatprep.subr.mxu0 0.0
      %497 = vmatpush1.msra.mxu0 0.0
      %498 = vmatprep.subr.mxu0 0.0
      %499 = vmatpush1.msra.mxu0 0.0
      %500 = vmatprep.subr.mxu0 0.0
      %501 = vmatpush1.msra.mxu0 0.0
      %502 = vmatprep.subr.mxu0 0.0
      %503 = vmatpush1.msra.mxu0 0.0
      %504 = vmatprep.subr.mxu0 0.0
      %505 = vmatpush1.msra.mxu0 0.0
      %506 = vmatprep.subr.mxu0 0.0
      %507 = vmatpush1.msra.mxu0 0.0
      %508 = vmatprep.subr.mxu0 0.0
      %509 = vmatpush1.msra.mxu0 0.0
      %510 = vmatprep.subr.mxu0 0.0
      %511 = vmatpush1.msra.mxu0 0.0
      %512 = vmatprep.subr.mxu0 0.0
      %513 = vmatpush1.msra.mxu0 0.0
      %514 = vmatprep.subr.mxu0 0.0
      %515 = vmatpush1.msra.mxu0 0.0
      %516 = vmatprep.mubr.f32.mxu0 0.0
      %517 = vmatmul.mubr.f32.gmra.mrb[0].mxu0 %v224
      %v518 = vpop.f32.mrb[0].mxu0
      %v519 = vadd.f32 %v449, %v518
      %v520 = vpop.f32.mrb[0].mxu0
      %521 = vdwg.mxu0
      %522 = vst [vmem:[%s219] sm:$0xff] %v519
      %p523 = scmp.lt.s32.totalorder %s18, 3
      %s524 = scalar_select %p523, %s18, 3
      %p525 = scmp.lt.s32.totalorder %s19, 0
      %s526 = scalar_select %p525, %s19, 0
      %s527 = sadd.s32 %s526, %s524
      %s528 = smul.addr %s527, 8
      %s529 = scalar_lea.vmem %s3, %s528
      // Predicated region
      $region33: #{classifier_forward.1} parent=31 // pred_check
        %p530 = pneg %p124
      $region34: #{classifier_forward.1} parent=31 // pred_check_branch
        %532 = sbr.rel (%p530) target = $region36
      $region35: #{classifier_forward.1} parent=31 // pred_region
        _
      $region36: #{classifier_forward.1} parent=31 // pred_fallthru
        _
    $region32: #{classifier_forward.1} parent=5 // pred_fallthru
      _
    %p533 = scmp.le.s32.totalorder 2, %s9
    // Predicated region
    $region37: #{classifier_forward.1} parent=5 // pred_check
      %p534 = pneg %p533
    $region38: #{classifier_forward.1} parent=5 // pred_check_branch
      %536 = sbr.rel (%p534) target = $region40
    $region39: #{classifier_forward.1} parent=5 // pred_region
      %s537 = ssub.s32 %s9, 2
      // Predicated region
      $region41: #{classifier_forward.1} parent=39 // pred_check
        %p538 = pneg %p130
      $region42: #{classifier_forward.1} parent=39 // pred_check_branch
        %540 = sbr.rel (%p538) target = $region44
      $region43: #{classifier_forward.1} parent=39 // pred_region
        %p541 = scmp.lt.s32.totalorder %s20, 3
        %s542 = scalar_select %p541, %s20, 3
        %p543 = scmp.lt.s32.totalorder %s21, 0
        %s544 = scalar_select %p543, %s21, 0
        %s545 = sadd.s32 %s544, %s542
        %s546 = smul.addr %s545, 8
        %s547 = scalar_lea.vmem %s3, %s546
      $region44: #{classifier_forward.1} parent=39 // pred_fallthru
        _
    $region40: #{classifier_forward.1} parent=5 // pred_fallthru
      _
  $region6: #{classifier_forward.1} parent=0 // loop_footer
    %s13 = sadd.s32 1, %s9
  $region7: #{classifier_forward.1} parent=0 // loop_footer_branch
    %8 = sbr.rel target = $region3
  $region8: #{classifier_forward.1} parent=0 // loop_exit
    _

</llo_original>
